<compile_context>
chip_gen: v7x
topology: tpu7x:2x2x1
jax: 0.10.0
libtpu: 0.0.40
codegen_flags: <defaults>
</compile_context>

<pallas_src>
import functools

import jax
import jax.numpy as jnp
from jax.experimental import pallas as pl
from jax.experimental.pallas import tpu as pltpu


def _sr_seg_kernel(sr_ref, w_ref, b_ref, sr_out_ref, seg_out_ref, *, C, NC):
    # sr_ref:      (1, C, T)  VMEM tile, pixels on the lane axis (lane-dense)
    # w_ref:       (C, NC)    SMEM  (norm folded into head: w' = w / std[:,None])
    # b_ref:       (NC,)      SMEM  (b' = b - (mean/std) @ w)
    # sr_out_ref:  (1, C, T)  clipped SR image
    # seg_out_ref: (1, NC, T) segmentation logits
    sr = sr_ref[0]                                      # (C, T)
    clipped = jnp.minimum(jnp.maximum(sr, 0.0), 1.0)    # clip_sr
    sr_out_ref[0] = clipped

    # seg = clipped @ w' + b'  (norm_sr already folded into w'/b').
    # Unrolled VPU linear combination over the C channels — no MXU for a K=3, N=2 contraction.
    for n in range(NC):
        acc = clipped[0:1, :] * w_ref[0, n] + b_ref[n]
        for c in range(1, C):
            acc = acc + clipped[c:c + 1, :] * w_ref[c, n]
        seg_out_ref[0, n:n + 1, :] = acc


def _pick_tile_hw(hw, target_lanes):
    """Largest lane-tile <= target that evenly divides H*W (multiple of 128 when tiling)."""
    if hw <= target_lanes:
        return hw                      # whole row: block == full dim is always legal
    if hw % 128 != 0:
        # TODO(synk): pad H*W to a multiple of 128 for very large non-aligned images.
        return hw
    t = (target_lanes // 128) * 128
    while t >= 128:
        if hw % t == 0:
            return t
        t -= 128
    return hw


def sr_model_forward(x, damy_kernel, sr_targets, params, *, target_lanes=64 * 1024):
    """SRModelWithLoss forward for the SCALE_FACTOR==1 config (see header).

    Returns (sr_preds, segment_preds, kernel_preds); sr_loss is None for this config.
    """
    mean, std, w, b = params["mean"], params["std"], params["w"], params["b"]
    B, C, H, W = sr_targets.shape
    NC = w.shape[1]
    HW = H * W

    # Fold the per-channel normalization into the 1x1-conv head (trace-time, tiny).
    inv_std = 1.0 / std.reshape(C)                       # (C,)
    w_fold = (w * inv_std[:, None]).astype(jnp.float32)  # (C, NC)
    b_fold = (b.reshape(NC) - (mean.reshape(C) * inv_std) @ w).astype(jnp.float32)  # (NC,)

    tile_hw = _pick_tile_hw(HW, target_lanes)
    assert HW % tile_hw == 0

    # NCHW -> (B, C, H*W): free reshape (H*W already contiguous per (b, c)); no transpose.
    sr3 = sr_targets.reshape(B, C, HW)

    grid = (B, HW // tile_hw)
    kernel = functools.partial(_sr_seg_kernel, C=C, NC=NC)

    sr_clipped3, seg3 = pl.pallas_call(
        kernel,
        out_shape=(
            jax.ShapeDtypeStruct((B, C, HW), jnp.float32),
            jax.ShapeDtypeStruct((B, NC, HW), jnp.float32),
        ),
        grid_spec=pltpu.PrefetchScalarGridSpec(
            num_scalar_prefetch=0,
            grid=grid,
            in_specs=[
                pl.BlockSpec((1, C, tile_hw), lambda bi, j: (bi, 0, j)),
                pl.BlockSpec(memory_space=pltpu.MemorySpace.SMEM),   # w_fold (C, NC)
                pl.BlockSpec(memory_space=pltpu.MemorySpace.SMEM),   # b_fold (NC,)
            ],
            out_specs=[
                pl.BlockSpec((1, C, tile_hw), lambda bi, j: (bi, 0, j)),
                pl.BlockSpec((1, NC, tile_hw), lambda bi, j: (bi, 0, j)),
            ],
        ),
        compiler_params=pltpu.CompilerParams(
            dimension_semantics=("parallel", "parallel"),
            # ~12 MiB needed at the default tile target (double-buffered, sublane-padded);
            # 32 MiB is explicit headroom and safe on v5e/v6e/v7x.
            vmem_limit_bytes=32 * 1024 * 1024,
        ),
    )(sr3, w_fold, b_fold)

    # (B, C, H*W) -> NCHW: free reshapes, no transpose.
    sr_preds = sr_clipped3.reshape(B, C, H, W)
    segment_preds = seg3.reshape(B, NC, H, W)

    # kernel_preds = torch.zeros(kernel_targets.shape)   (sr_model is None branch)
    kernel_preds = jnp.zeros(damy_kernel.shape, dtype=damy_kernel.dtype)

    return sr_preds, segment_preds, kernel_preds


def make_params(num_channels=3, num_classes=2, seed=0):
    """Deterministic parameter init (synthetic; no checkpoint load)."""
    key = jax.random.PRNGKey(seed)
    kw, kb = jax.random.split(key)
    # cfg.INPUT.MEAN / cfg.INPUT.STD (ImageNet-style constants)
    mean = jnp.array([[0.485, 0.456, 0.406]], dtype=jnp.float32)
    std = jnp.array([[0.229, 0.224, 0.225]], dtype=jnp.float32)
    w = jax.random.normal(kw, (num_channels, num_classes), dtype=jnp.float32) * 0.1
    b = jax.random.normal(kb, (1, num_classes), dtype=jnp.float32) * 0.01
    return {"mean": mean, "std": std, "w": w, "b": b}


if __name__ == "__main__":
    # Small shapes consistent with the module:
    #   x / sr_targets: (B, 3, H, W) NCHW image batch (scale_factor = 1 -> same size)
    #   damy_kernel:    (B, ksize^2, 1, 1) blur-kernel vector (ksize_output = 4)
    B, C, H, W = 2, 3, 16, 16
    ksize_out = 4
    num_classes = 2

    key = jax.random.PRNGKey(0)
    kx, kt, kk = jax.random.split(key, 3)
    x = jax.random.uniform(kx, (B, C, H, W), dtype=jnp.float32)
    # sr_targets slightly out of [0,1] to exercise clip_sr
    sr_targets = jax.random.uniform(kt, (B, C, H, W), dtype=jnp.float32, minval=-0.2, maxval=1.2)
    damy_kernel = jax.random.uniform(kk, (B, ksize_out * ksize_out, 1, 1), dtype=jnp.float32)

    params = make_params(num_channels=C, num_classes=num_classes, seed=0)

    sr_preds, segment_preds, kernel_preds = sr_model_forward(x, damy_kernel, sr_targets, params)
    jax.block_until_ready((sr_preds, segment_preds, kernel_preds))

    # pure-JAX reference check of the kernel path (unfolded norm + matmul head)
    sr_ref = jnp.clip(sr_targets, 0.0, 1.0)
    normed_ref = (sr_ref - params["mean"].reshape(1, C, 1, 1)) / params["std"].reshape(1, C, 1, 1)
    seg_ref = jnp.einsum("bchw,cn->bnhw", normed_ref, params["w"]) + params["b"].reshape(1, -1, 1, 1)
    assert jnp.allclose(sr_preds, sr_ref, atol=1e-5)
    assert jnp.allclose(segment_preds, seg_ref, atol=1e-5)
    assert jnp.all(kernel_preds == 0)
    assert sr_preds.shape == (B, C, H, W)
    assert segment_preds.shape == (B, num_classes, H, W)
    assert kernel_preds.shape == damy_kernel.shape

    print("KERNEL_OK")
</pallas_src>

<mosaic_0001>
module attributes {stable_mosaic.version = 11 : i64} {
  func.func @_sr_seg_kernel(%arg0: i32, %arg1: i32, %arg2: memref<1x3x256xf32, #tpu.memory_space<vmem>>, %arg3: memref<3x2xf32, #tpu.memory_space<smem>>, %arg4: memref<2xf32, #tpu.memory_space<smem>>, %arg5: memref<1x3x256xf32, #tpu.memory_space<vmem>>, %arg6: memref<1x2x256xf32, #tpu.memory_space<vmem>>) attributes {dimension_semantics = [#tpu.dimension_semantics<parallel>, #tpu.dimension_semantics<parallel>], iteration_bounds = array<i64: 2, 1>, scalar_prefetch = 0 : i64, scratch_operands = 0 : i64, tpu.core_type = #tpu.core_type<tc>, window_params = [{transform_indices = @transform_0, window_bounds = array<i64: 1, 3, 256>}, {transform_indices = @transform_1, window_bounds = array<i64: 3, 2>}, {transform_indices = @transform_2, window_bounds = array<i64: 2>}, {transform_indices = @transform_3, window_bounds = array<i64: 1, 3, 256>}, {transform_indices = @transform_4, window_bounds = array<i64: 1, 2, 256>}]} {
    %c0 = arith.constant 0 : index
    %c0_0 = arith.constant 0 : index
    %c0_1 = arith.constant 0 : index
    %0 = vector.load %arg2[%c0, %c0_0, %c0_1] : memref<1x3x256xf32, #tpu.memory_space<vmem>>, vector<1x3x256xf32>
    %1 = vector.shape_cast %0 : vector<1x3x256xf32> to vector<3x256xf32>
    %cst = arith.constant 0.000000e+00 : f32
    %2 = vector.broadcast %cst : f32 to vector<3x256xf32>
    %3 = arith.maximumf %1, %2 : vector<3x256xf32>
    %cst_2 = arith.constant 1.000000e+00 : f32
    %4 = vector.broadcast %cst_2 : f32 to vector<3x256xf32>
    %5 = arith.minimumf %3, %4 : vector<3x256xf32>
    %c0_3 = arith.constant 0 : index
    %c0_4 = arith.constant 0 : index
    %c0_5 = arith.constant 0 : index
    %6 = vector.load %arg5[%c0_3, %c0_4, %c0_5] : memref<1x3x256xf32, #tpu.memory_space<vmem>>, vector<1x3x256xf32>
    %7 = vector.shape_cast %6 : vector<1x3x256xf32> to vector<3x256xf32>
    %8 = vector.shape_cast %5 : vector<3x256xf32> to vector<1x3x256xf32>
    tpu.vector_store %arg5[%c0_3, %c0_4, %c0_5], %8 {strides = array<i32>} : memref<1x3x256xf32, #tpu.memory_space<vmem>>, vector<1x3x256xf32>,
    %9 = vector.extract_strided_slice %5 {offsets = [0, 0], sizes = [1, 256], strides = [1, 1]} : vector<3x256xf32> to vector<1x256xf32>
    %c0_6 = arith.constant 0 : index
    %c0_7 = arith.constant 0 : index
    %10 = memref.load %arg3[%c0_6, %c0_7] : memref<3x2xf32, #tpu.memory_space<smem>>
    %11 = vector.broadcast %10 : f32 to vector<1x256xf32>
    %12 = arith.mulf %9, %11 : vector<1x256xf32>
    %c0_8 = arith.constant 0 : index
    %13 = memref.load %arg4[%c0_8] : memref<2xf32, #tpu.memory_space<smem>>
    %14 = vector.broadcast %13 : f32 to vector<1x256xf32>
    %15 = arith.addf %12, %14 : vector<1x256xf32>
    %16 = vector.extract_strided_slice %5 {offsets = [1, 0], sizes = [1, 256], strides = [1, 1]} : vector<3x256xf32> to vector<1x256xf32>
    %c1 = arith.constant 1 : index
    %c0_9 = arith.constant 0 : index
    %17 = memref.load %arg3[%c1, %c0_9] : memref<3x2xf32, #tpu.memory_space<smem>>
    %18 = vector.broadcast %17 : f32 to vector<1x256xf32>
    %19 = arith.mulf %16, %18 : vector<1x256xf32>
    %20 = arith.addf %15, %19 : vector<1x256xf32>
    %21 = vector.extract_strided_slice %5 {offsets = [2, 0], sizes = [1, 256], strides = [1, 1]} : vector<3x256xf32> to vector<1x256xf32>
    %c2 = arith.constant 2 : index
    %c0_10 = arith.constant 0 : index
    %22 = memref.load %arg3[%c2, %c0_10] : memref<3x2xf32, #tpu.memory_space<smem>>
    %23 = vector.broadcast %22 : f32 to vector<1x256xf32>
    %24 = arith.mulf %21, %23 : vector<1x256xf32>
    %25 = arith.addf %20, %24 : vector<1x256xf32>
    %c0_11 = arith.constant 0 : index
    %c0_12 = arith.constant 0 : index
    %c0_13 = arith.constant 0 : index
    %26 = vector.load %arg6[%c0_11, %c0_12, %c0_13] : memref<1x2x256xf32, #tpu.memory_space<vmem>>, vector<1x1x256xf32>
    %27 = vector.shape_cast %26 : vector<1x1x256xf32> to vector<1x256xf32>
    %28 = vector.shape_cast %25 : vector<1x256xf32> to vector<1x1x256xf32>
    tpu.vector_store %arg6[%c0_11, %c0_12, %c0_13], %28 {strides = array<i32>} : memref<1x2x256xf32, #tpu.memory_space<vmem>>, vector<1x1x256xf32>,
    %29 = vector.extract_strided_slice %5 {offsets = [0, 0], sizes = [1, 256], strides = [1, 1]} : vector<3x256xf32> to vector<1x256xf32>
    %c0_14 = arith.constant 0 : index
    %c1_15 = arith.constant 1 : index
    %30 = memref.load %arg3[%c0_14, %c1_15] : memref<3x2xf32, #tpu.memory_space<smem>>
    %31 = vector.broadcast %30 : f32 to vector<1x256xf32>
    %32 = arith.mulf %29, %31 : vector<1x256xf32>
    %c1_16 = arith.constant 1 : index
    %33 = memref.load %arg4[%c1_16] : memref<2xf32, #tpu.memory_space<smem>>
    %34 = vector.broadcast %33 : f32 to vector<1x256xf32>
    %35 = arith.addf %32, %34 : vector<1x256xf32>
    %36 = vector.extract_strided_slice %5 {offsets = [1, 0], sizes = [1, 256], strides = [1, 1]} : vector<3x256xf32> to vector<1x256xf32>
    %c1_17 = arith.constant 1 : index
    %c1_18 = arith.constant 1 : index
    %37 = memref.load %arg3[%c1_17, %c1_18] : memref<3x2xf32, #tpu.memory_space<smem>>
    %38 = vector.broadcast %37 : f32 to vector<1x256xf32>
    %39 = arith.mulf %36, %38 : vector<1x256xf32>
    %40 = arith.addf %35, %39 : vector<1x256xf32>
    %41 = vector.extract_strided_slice %5 {offsets = [2, 0], sizes = [1, 256], strides = [1, 1]} : vector<3x256xf32> to vector<1x256xf32>
    %c2_19 = arith.constant 2 : index
    %c1_20 = arith.constant 1 : index
    %42 = memref.load %arg3[%c2_19, %c1_20] : memref<3x2xf32, #tpu.memory_space<smem>>
    %43 = vector.broadcast %42 : f32 to vector<1x256xf32>
    %44 = arith.mulf %41, %43 : vector<1x256xf32>
    %45 = arith.addf %40, %44 : vector<1x256xf32>
    %c0_21 = arith.constant 0 : index
    %c1_22 = arith.constant 1 : index
    %c0_23 = arith.constant 0 : index
    %46 = vector.load %arg6[%c0_21, %c1_22, %c0_23] : memref<1x2x256xf32, #tpu.memory_space<vmem>>, vector<1x1x256xf32>
    %47 = vector.shape_cast %46 : vector<1x1x256xf32> to vector<1x256xf32>
    %48 = vector.shape_cast %45 : vector<1x256xf32> to vector<1x1x256xf32>
    tpu.vector_store %arg6[%c0_21, %c1_22, %c0_23], %48 {strides = array<i32>} : memref<1x2x256xf32, #tpu.memory_space<vmem>>, vector<1x1x256xf32>,
    return
  }
  func.func @transform_0(%arg0: i32, %arg1: i32) -> (i32, i32, i32) {
    %c0_i32 = arith.constant 0 : i32
    %c0_i32_0 = arith.constant 0 : i32
    return %arg0, %c0_i32, %arg1 : i32, i32, i32
  }
  func.func @transform_1(%arg0: i32, %arg1: i32) -> (i32, i32) {
    %c0_i32 = arith.constant 0 : i32
    %c0_i32_0 = arith.constant 0 : i32
    %c0_i32_1 = arith.constant 0 : i32
    return %c0_i32, %c0_i32_0 : i32, i32
  }
  func.func @transform_2(%arg0: i32, %arg1: i32) -> i32 {
    %c0_i32 = arith.constant 0 : i32
    %c0_i32_0 = arith.constant 0 : i32
    return %c0_i32 : i32
  }
  func.func @transform_3(%arg0: i32, %arg1: i32) -> (i32, i32, i32) {
    %c0_i32 = arith.constant 0 : i32
    %c0_i32_0 = arith.constant 0 : i32
    return %arg0, %c0_i32, %arg1 : i32, i32, i32
  }
  func.func @transform_4(%arg0: i32, %arg1: i32) -> (i32, i32, i32) {
    %c0_i32 = arith.constant 0 : i32
    %c0_i32_0 = arith.constant 0 : i32
    return %arg0, %c0_i32, %arg1 : i32, i32, i32
  }
}

</mosaic_0001>

<llo_original>
// kernel: tpu_custom_call.1
$region0: #{tpu_custom_call.1}
  #allocation0 [shape = 'u32[]', space=smem, size = 0x4, offset = 0x4, fixed_abs, tag = 'smem constant byte address 0x4 - core index']
  #allocation1 [shape = 'u32[144,128]{1,0:T(1,128)}', space=vmem, size = 0x12000, scoped, tag = 'internal scratch']
  %s0 = inlined_call_operand.vmem [shape: f32[2,3,256], index: 0, kind: input, shape index: {}]
  %s1 = inlined_call_operand.vmem [shape: f32[3,2], index: 1, kind: input, shape index: {}]
  %s2 = inlined_call_operand.vmem [shape: f32[2], index: 2, kind: input, shape index: {}]
  %s3 = inlined_call_operand.vmem [shape: f32[2,3,256], index: 3, kind: output, shape index: {0}]
  %s4 = inlined_call_operand.hbm [shape: f32[2,2,256], index: 4, kind: output, shape index: {1}]
  %5 = xla_tuple %s3, %s4
  %s6 = sld [smem:[#allocation0]]
  $region61: #{tpu_custom_call.1} parent=0
    _
  %s8 = ssub.s32 1, %s6
  %s9 = scalar_select 0, %s8, %s6
  $region1: #{tpu_custom_call.1} parent=0
    #allocation2 [shape = 'u8[2048]{0}', space=smem, size = 0x800, scoped, tag = 'input window, operand 1, single buffered']
    #allocation3 [shape = 's32[2]{0}', space=sflag, size = 0x8, scoped, tag = 'scoped memory for tpu_custom_call.1']
    #allocation4 [shape = 's32[2]{0}', space=sflag, size = 0x8, scoped, tag = 'scoped memory for tpu_custom_call.1']
    #allocation5 [shape = 'u8[512]{0}', space=smem, size = 0x200, scoped, tag = 'input window, operand 2, single buffered']
    #allocation6 [shape = 's32[1]{0}', space=sflag, size = 0x4, scoped, tag = 'scoped memory for tpu_custom_call.1']
    #allocation7 [shape = 'u8[4096]{0}', space=vmem, size = 0x1000, scoped, tag = 'output window, operand 1']
    %10 = vsyncpa [#allocation4], 0
    %11 = vsyncpa [#allocation6], 0
    %12 = vsyncpa [#allocation3], 0
    %s13 = scalar_lea.sflag [#allocation3], 1
    %14 = vsyncpa %s13, 0
    loop: start=0, step=1, limit=4
    $region2: #{tpu_custom_call.1} parent=1 // loop_pre_header
      _
    $region3: #{tpu_custom_call.1} parent=1 // loop_header
      %s16 = sphi 0, %s20
      %p17 = scmp.ge.s32.totalorder %s16, 4
      %s23 = sphi 0, %s35
      %s24 = sphi 0, %s31
      %s25 = sphi 0, %s23
      %s26 = sphi 0, %s24
      %s27 = sphi 0, %s25
      %s28 = sphi 0, %s26
      %s40 = sphi 0, %s42
      %s43 = sphi 0, %s40
      %s44 = sphi 0, %s43
      %s60 = sphi 0, %s44
      %s64 = sphi 0, %s64
      %s66 = sphi 0, %s64
      %s67 = sphi 0, %s66
      %s81 = sphi 0, %s67
      %s85 = sphi 0, %s85
      %s87 = sphi 0, %s85
      %s88 = sphi 0, %s87
      %s102 = sphi 0, %s88
      %s110 = sphi 0, %s112
      %s113 = sphi 0, %s110
      %s114 = sphi 0, %s113
      %s130 = sphi 0, %s114
      %s138 = sphi 0, %s140
      %s141 = sphi 0, %s138
      %s142 = sphi 0, %s141
      %s158 = sphi 0, %s142
    $region4: #{tpu_custom_call.1} parent=1 // loop_header_branch
      %19 = sbr.rel (%p17) target = $region8
    $region5: #{tpu_custom_call.1} parent=1 // loop_body
      %s21 = ssub.s32 %s16, 1
      %s22 = ssub.s32 %s16, 2
      %s29 = sadd.s32 1, %s24
      %p30 = scmp.ge.s32.totalorder %s29, 1
      %s31 = scalar_select %p30, 0, %s29
      %s32 = sadd.s32 1, %s23
      %s33 = scalar_select %p30, %s32, %s23
      %p34 = scmp.ge.s32.totalorder %s33, 2
      %s35 = scalar_select %p34, 0, %s33
      %s36 = ssub.s32 %s23, %s35
      %s37 = ssub.s32 %s24, %s31
      %s38 = sor.u32 %s36, %s37
      %p39 = scmp.eq.s32.totalorder %s38, 0
      %s41 = sadd.s32 %s40, 1
      %s42 = scalar_select %p39, %s40, %s41
      %p45 = pneg %p39
      %p46 = scmp.eq.s32.totalorder %s16, 1
      %p47 = por %p45, %p46
      %p48 = scmp.ne.s32.totalorder %s40, %s43
      %p49 = scmp.eq.s32.totalorder %s16, 0
      %p50 = por %p48, %p49
      %p51 = scmp.ne.s32.totalorder %s40, %s43
      %p52 = scmp.eq.s32.totalorder %s21, 1
      %p53 = por %p51, %p52
      %p54 = scmp.ne.s32.totalorder %s43, %s44
      %p55 = scmp.eq.s32.totalorder %s21, 0
      %p56 = por %p54, %p55
      %p57 = scmp.ne.s32.totalorder %s43, %s44
      %p58 = scmp.eq.s32.totalorder %s22, 1
      %p59 = por %p57, %p58
      %p61 = scmp.ne.s32.totalorder %s44, %s60
      %p62 = scmp.eq.s32.totalorder %s22, 0
      %p63 = por %p61, %p62
      %s65 = sadd.s32 %s64, 1
      %p68 = scmp.eq.s32.totalorder %s16, 1
      %p69 = scmp.ne.s32.totalorder %s64, %s66
      %p70 = scmp.eq.s32.totalorder %s16, 0
      %p71 = por %p69, %p70
      %p72 = scmp.ne.s32.totalorder %s64, %s66
      %p73 = scmp.eq.s32.totalorder %s21, 1
      %p74 = por %p72, %p73
      %p75 = scmp.ne.s32.totalorder %s66, %s67
      %p76 = scmp.eq.s32.totalorder %s21, 0
      %p77 = por %p75, %p76
      %p78 = scmp.ne.s32.totalorder %s66, %s67
      %p79 = scmp.eq.s32.totalorder %s22, 1
      %p80 = por %p78, %p79
      %p82 = scmp.ne.s32.totalorder %s67, %s81
      %p83 = scmp.eq.s32.totalorder %s22, 0
      %p84 = por %p82, %p83
      %s86 = sadd.s32 %s85, 1
      %p89 = scmp.eq.s32.totalorder %s16, 1
      %p90 = scmp.ne.s32.totalorder %s85, %s87
      %p91 = scmp.eq.s32.totalorder %s16, 0
      %p92 = por %p90, %p91
      %p93 = scmp.ne.s32.totalorder %s85, %s87
      %p94 = scmp.eq.s32.totalorder %s21, 1
      %p95 = por %p93, %p94
      %p96 = scmp.ne.s32.totalorder %s87, %s88
      %p97 = scmp.eq.s32.totalorder %s21, 0
      %p98 = por %p96, %p97
      %p99 = scmp.ne.s32.totalorder %s87, %s88
      %p100 = scmp.eq.s32.totalorder %s22, 1
      %p101 = por %p99, %p100
      %p103 = scmp.ne.s32.totalorder %s88, %s102
      %p104 = scmp.eq.s32.totalorder %s22, 0
      %p105 = por %p103, %p104
      %s106 = ssub.s32 %s23, %s35
      %s107 = ssub.s32 %s24, %s31
      %s108 = sor.u32 %s106, %s107
      %p109 = scmp.eq.s32.totalorder %s108, 0
      %s111 = sadd.s32 %s110, 1
      %s112 = scalar_select %p109, %s110, %s111
      %p115 = pneg %p109
      %p116 = scmp.eq.s32.totalorder %s16, 1
      %p117 = por %p115, %p116
      %p118 = scmp.ne.s32.totalorder %s110, %s113
      %p119 = scmp.eq.s32.totalorder %s16, 0
      %p120 = por %p118, %p119
      %p121 = scmp.ne.s32.totalorder %s110, %s113
      %p122 = scmp.eq.s32.totalorder %s21, 1
      %p123 = por %p121, %p122
      %p124 = scmp.ne.s32.totalorder %s113, %s114
      %p125 = scmp.eq.s32.totalorder %s21, 0
      %p126 = por %p124, %p125
      %p127 = scmp.ne.s32.totalorder %s113, %s114
      %p128 = scmp.eq.s32.totalorder %s22, 1
      %p129 = por %p127, %p128
      %p131 = scmp.ne.s32.totalorder %s114, %s130
      %p132 = scmp.eq.s32.totalorder %s22, 0
      %p133 = por %p131, %p132
      %s134 = ssub.s32 %s23, %s35
      %s135 = ssub.s32 %s24, %s31
      %s136 = sor.u32 %s134, %s135
      %p137 = scmp.eq.s32.totalorder %s136, 0
      %s139 = sadd.s32 %s138, 1
      %s140 = scalar_select %p137, %s138, %s139
      %p143 = pneg %p137
      %p144 = scmp.eq.s32.totalorder %s16, 1
      %p145 = por %p143, %p144
      %p146 = scmp.ne.s32.totalorder %s138, %s141
      %p147 = scmp.eq.s32.totalorder %s16, 0
      %p148 = por %p146, %p147
      %p149 = scmp.ne.s32.totalorder %s138, %s141
      %p150 = scmp.eq.s32.totalorder %s21, 1
      %p151 = por %p149, %p150
      %p152 = scmp.ne.s32.totalorder %s141, %s142
      %p153 = scmp.eq.s32.totalorder %s21, 0
      %p154 = por %p152, %p153
      %p155 = scmp.ne.s32.totalorder %s141, %s142
      %p156 = scmp.eq.s32.totalorder %s22, 1
      %p157 = por %p155, %p156
      %p159 = scmp.ne.s32.totalorder %s142, %s158
      %p160 = scmp.eq.s32.totalorder %s22, 0
      %p161 = por %p159, %p160
      %p162 = scmp.le.s32.totalorder 1, %s16
      %p163 = scmp.lt.s32.totalorder %s16, 3
      %p164 = pnand %p162, %p163
      %p165 = pneg %p164
      // Predicated region
      $region9: #{tpu_custom_call.1} parent=5 // pred_check
        _
      $region10: #{tpu_custom_call.1} parent=5 // pred_check_branch
        %167 = sbr.rel (%p164) target = $region12
      $region11: #{tpu_custom_call.1} parent=5 // pred_region
        %s168 = ssub.s32 %s16, 1
        // Predicated region
        $region13: #{tpu_custom_call.1} parent=11 // pred_check
          %p169 = pneg %p77
        $region14: #{tpu_custom_call.1} parent=11 // pred_check_branch
          %171 = sbr.rel (%p169) target = $region16
        $region15: #{tpu_custom_call.1} parent=11 // pred_region
          %s173 = ssub.s32 64, 64
          %174 = vsyncadd [#allocation4], %s173
          %s176 = sshll.u32 %s1, 4
          %s177 = int_to_ptr.vmem [resolvable:$true] %s176
          %179 = dma.vmem_to_smem %s177, 64, [#allocation2], [#allocation4]
        $region16: #{tpu_custom_call.1} parent=11 // pred_fallthru
          _
        // Predicated region
        $region17: #{tpu_custom_call.1} parent=11 // pred_check
          %p180 = pneg %p98
        $region18: #{tpu_custom_call.1} parent=11 // pred_check_branch
          %182 = sbr.rel (%p180) target = $region20
        $region19: #{tpu_custom_call.1} parent=11 // pred_region
          %s184 = ssub.s32 16, 16
          %185 = vsyncadd [#allocation6], %s184
          %s187 = sshll.u32 %s2, 4
          %s188 = int_to_ptr.vmem [resolvable:$true] %s187
          %190 = dma.vmem_to_smem %s188, 16, [#allocation5], [#allocation6]
        $region20: #{tpu_custom_call.1} parent=11 // pred_fallthru
          _
      $region12: #{tpu_custom_call.1} parent=5 // pred_fallthru
        _
      %p191 = scmp.lt.s32.totalorder %s16, 2
      // Predicated region
      $region21: #{tpu_custom_call.1} parent=5 // pred_check
        %p192 = pneg %p191
      $region22: #{tpu_custom_call.1} parent=5 // pred_check_branch
        %194 = sbr.rel (%p192) target = $region24
      $region23: #{tpu_custom_call.1} parent=5 // pred_region
        // Predicated region
        $region25: #{tpu_custom_call.1} parent=23 // pred_check
          %p195 = pneg %p50
        $region26: #{tpu_custom_call.1} parent=23 // pred_check_branch
          %197 = sbr.rel (%p195) target = $region28
        $region27: #{tpu_custom_call.1} parent=23 // pred_region
          %s198 = smul.u32 2, %s24
          %p199 = scmp.lt.s32.totalorder %s23, 1
          %s200 = scalar_select %p199, %s23, 1
          %p201 = scmp.lt.s32.totalorder %s198, 1
          %s202 = scalar_select %p201, %s198, 1
          %s203 = smul.addr %s200, 2
          %s204 = sadd.s32 %s202, %s203
          %s205 = smul.addr %s204, 4
          %s206 = scalar_lea.vmem %s0, %s205
          %s207 = smul.u32 2, %s24
        $region28: #{tpu_custom_call.1} parent=23 // pred_fallthru
          _
      $region24: #{tpu_custom_call.1} parent=5 // pred_fallthru
        _
      %p208 = scmp.le.s32.totalorder 1, %s16
      %p209 = scmp.lt.s32.totalorder %s16, 3
      %p210 = pnand %p208, %p209
      %p211 = pneg %p210
      // Predicated region
      $region29: #{tpu_custom_call.1} parent=5 // pred_check
        _
      $region30: #{tpu_custom_call.1} parent=5 // pred_check_branch
        %213 = sbr.rel (%p210) target = $region32
      $region31: #{tpu_custom_call.1} parent=5 // pred_region
        %s214 = ssub.s32 %s16, 1
        // Predicated region
        $region33: #{tpu_custom_call.1} parent=31 // pred_check
          %p215 = pneg %p77
        $region34: #{tpu_custom_call.1} parent=31 // pred_check_branch
          %217 = sbr.rel (%p215) target = $region36
        $region35: #{tpu_custom_call.1} parent=31 // pred_region
          %218 = dma.done [#allocation4], 64
        $region36: #{tpu_custom_call.1} parent=31 // pred_fallthru
          _
        // Predicated region
        $region37: #{tpu_custom_call.1} parent=31 // pred_check
          %p219 = pneg %p98
        $region38: #{tpu_custom_call.1} parent=31 // pred_check_branch
          %221 = sbr.rel (%p219) target = $region40
        $region39: #{tpu_custom_call.1} parent=31 // pred_region
          %222 = dma.done [#allocation6], 16
        $region40: #{tpu_custom_call.1} parent=31 // pred_fallthru
          _
        %223 = sfence
        %s224 = smul.u32 2, %s26
        %p225 = scmp.lt.s32.totalorder %s25, 1
        %s226 = scalar_select %p225, %s25, 1
        %p227 = scmp.lt.s32.totalorder %s224, 1
        %s228 = scalar_select %p227, %s224, 1
        %s229 = smul.addr %s226, 2
        %s230 = sadd.s32 %s228, %s229
        %s231 = smul.addr %s230, 4
        %s232 = scalar_lea.vmem %s0, %s231
        %p233 = pneg %p56
        %p234 = pneg %p53
        %p235 = pneg %p77
        %p236 = pneg %p74
        %p237 = pneg %p98
        %p238 = pneg %p95
        %p239 = pneg %p126
        %p240 = pneg %p123
        %s241 = smul.u32 2, %s26
        %p242 = scmp.lt.s32.totalorder %s25, 1
        %s243 = scalar_select %p242, %s25, 1
        %p244 = scmp.lt.s32.totalorder %s241, 1
        %s245 = scalar_select %p244, %s241, 1
        %s246 = smul.addr %s243, 2
        %s247 = sadd.s32 %s245, %s246
        %s248 = smul.addr %s247, 4
        %s249 = scalar_lea.vmem %s3, %s248
        %p250 = pneg %p154
        %p251 = pneg %p151
        %s252 = sand.u32 %s141, 1
        %s253 = scalar_lea.sflag [#allocation3], %s252
        %s254 = sand.u32 %s141, 1
        %s255 = smul.addr %s254, 4
        %s256 = scalar_lea.vmem [#allocation7], %s255
        %s257 = smul.u32 2, %s26
        %p258 = scmp.lt.s32.totalorder %s25, 1
        %s259 = scalar_select %p258, %s25, 1
        %p260 = scmp.lt.s32.totalorder %s257, 1
        %s261 = scalar_select %p260, %s257, 1
        %s262 = smul.addr %s259, 2
        %s263 = sadd.s32 %s261, %s262
        %s264 = smul.addr %s263, 4
        %s265 = scalar_lea.vmem %s0, %s264
        %s266 = smul.u32 2, %s26
        %s267 = smul.u32 2, %s26
        %p268 = scmp.lt.s32.totalorder %s25, 1
        %s269 = scalar_select %p268, %s25, 1
        %p270 = scmp.lt.s32.totalorder %s267, 1
        %s271 = scalar_select %p270, %s267, 1
        %s272 = smul.addr %s269, 2
        %s273 = sadd.s32 %s271, %s272
        %s274 = smul.addr %s273, 4
        %s275 = scalar_lea.vmem %s3, %s274
        %s276 = smul.u32 2, %s26
        %s277 = smul.u32 2, %s26
        %v278 = vld [vmem:[%s265] sm:$0x77]
        %v279 = vmax.f32 %v278, 0.0
        %v280 = vmin.f32 %v279, 1.0
        %281 = vst [vmem:[%s275] sm:$0x77] %v280
        %s282 = sld [smem:[#allocation2]]
        %v283 = vstv %s282
        %v284 = vmul.f32 %v280, %v283
        %s285 = sld [smem:[#allocation5]]
        %v286 = vstv %s285
        %v287 = vadd.f32 %v284, %v286
        %s288 = sld [smem:[#allocation2 + $0x80]]
        %v289 = vstv %s288
        %v290 = vmul.f32 %v280, %v289
        %v292 = vrot.slane %v290, 5
        %v293 = vrot.slane %v292, 4
        %v295 = vadd.f32 %v287, %v293
        %s296 = sld [smem:[#allocation2 + $0x100]]
        %v297 = vstv %s296
        %v298 = vmul.f32 %v280, %v297
        %v300 = vrot.slane %v298, 6
        %v301 = vrot.slane %v300, 4
        %v303 = vadd.f32 %v295, %v301
        %v306 = vunpack.c.l.s4 1966171168
        %v307 = vunpack.c.0.s8 %v306
        %v308 = vlaneseq
        %v309 = vshrl.u32 %v308, 7
        %v310 = vsub.s32 %v307, %v309
        %v311 = vrot.slane %v303, %v310
        %v313 = vunpack.c.l.s4 1966171168
        %v314 = vunpack.c.0.s8 %v313
        %v315 = vlaneseq
        %v316 = vshrl.u32 %v315, 7
        %v317 = vsub.s32 %v314, %v316
        %v318 = vrot.slane %v311, %v317
        %v320 = vlaneseq
        %vm321 = vcmp.ge.s32.totalorder %v320, 0
        %vm322 = vcmp.lt.s32.totalorder %v320, 256
        %vm323 = vmand %vm321, %vm322
        %324 = vst.msk [vmem:[%s256] ss:$2 sm:$0x3] %vm323, %v318
        %s325 = sld [smem:[#allocation2 + $0x1]]
        %v326 = vstv %s325
        %v327 = vmul.f32 %v280, %v326
        %s328 = sld [smem:[#allocation5 + $0x1]]
        %v329 = vstv %s328
        %v330 = vadd.f32 %v327, %v329
        %s331 = sld [smem:[#allocation2 + $0x81]]
        %v332 = vstv %s331
        %v333 = vmul.f32 %v280, %v332
        %v335 = vrot.slane %v333, 5
        %v336 = vrot.slane %v335, 4
        %v338 = vadd.f32 %v330, %v336
        %s339 = sld [smem:[#allocation2 + $0x101]]
        %v340 = vstv %s339
        %v341 = vmul.f32 %v280, %v340
        %v343 = vrot.slane %v341, 6
        %v344 = vrot.slane %v343, 4
        %v346 = vadd.f32 %v338, %v344
        %v349 = vunpack.c.l.s4 1966171168
        %v350 = vunpack.c.0.s8 %v349
        %v351 = vlaneseq
        %v352 = vshrl.u32 %v351, 7
        %v353 = vsub.s32 %v350, %v352
        %v354 = vrot.slane %v346, %v353
        %v356 = vunpack.c.l.s4 1966171168
        %v357 = vunpack.c.0.s8 %v356
        %v358 = vlaneseq
        %v359 = vshrl.u32 %v358, 7
        %v360 = vsub.s32 %v357, %v359
        %v361 = vrot.slane %v354, %v360
        %s363 = scalar_lea.vmem %s256, 1 [#allocation7]
        %364 = vst.msk [vmem:[%s363] ss:$2 sm:$0x3] %vm323, %v361
        %s365 = smul.u32 2, %s26
        %p366 = scmp.lt.s32.totalorder %s25, 1
        %s367 = scalar_select %p366, %s25, 1
        %p368 = scmp.lt.s32.totalorder %s365, 1
        %s369 = scalar_select %p368, %s365, 1
        %s370 = smul.addr %s367, 2
        %s371 = sadd.s32 %s369, %s370
        %s372 = smul.addr %s371, 4
        %s373 = scalar_lea.vmem %s3, %s372
        %s374 = sand.u32 %s141, 1
        %s375 = scalar_lea.sflag [#allocation3], %s374
        %s376 = sand.u32 %s141, 1
        %s377 = smul.addr %s376, 4
        %s378 = scalar_lea.vmem [#allocation7], %s377
        // Predicated region
        $region41: #{tpu_custom_call.1} parent=31 // pred_check
          %p379 = pneg %p123
        $region42: #{tpu_custom_call.1} parent=31 // pred_check_branch
          %381 = sbr.rel (%p379) target = $region44
        $region43: #{tpu_custom_call.1} parent=31 // pred_region
          %s382 = smul.u32 2, %s26
        $region44: #{tpu_custom_call.1} parent=31 // pred_fallthru
          _
        // Predicated region
        $region45: #{tpu_custom_call.1} parent=31 // pred_check
          %p383 = pneg %p151
        $region46: #{tpu_custom_call.1} parent=31 // pred_check_branch
          %385 = sbr.rel (%p383) target = $region48
        $region47: #{tpu_custom_call.1} parent=31 // pred_region
          %s386 = smul.u32 2, %s26
          %s388 = ssub.s32 64, 64
          %389 = vsyncadd %s375, %s388
          %s390 = smul.addr %s25, 2
          %s391 = sadd.s32 %s386, %s390
          %s392 = smul.addr %s391, 32
          %s393 = scalar_lea.hbm %s4, %s392
          %s395 = sshll.u32 %s378, 4
          %s396 = int_to_ptr.vmem [resolvable:$true] %s395
          %398 = dma.vmem_to_hbm [thread:$0]  %s396, 64, %s393, %s375
        $region48: #{tpu_custom_call.1} parent=31 // pred_fallthru
          _
      $region32: #{tpu_custom_call.1} parent=5 // pred_fallthru
        _
      %p399 = scmp.le.s32.totalorder 2, %s16
      // Predicated region
      $region49: #{tpu_custom_call.1} parent=5 // pred_check
        %p400 = pneg %p399
      $region50: #{tpu_custom_call.1} parent=5 // pred_check_branch
        %402 = sbr.rel (%p400) target = $region52
      $region51: #{tpu_custom_call.1} parent=5 // pred_region
        %s403 = ssub.s32 %s16, 2
        // Predicated region
        $region53: #{tpu_custom_call.1} parent=51 // pred_check
          %p404 = pneg %p129
        $region54: #{tpu_custom_call.1} parent=51 // pred_check_branch
          %406 = sbr.rel (%p404) target = $region56
        $region55: #{tpu_custom_call.1} parent=51 // pred_region
          %s407 = smul.u32 2, %s28
          %p408 = scmp.lt.s32.totalorder %s27, 1
          %s409 = scalar_select %p408, %s27, 1
          %p410 = scmp.lt.s32.totalorder %s407, 1
          %s411 = scalar_select %p410, %s407, 1
          %s412 = smul.addr %s409, 2
          %s413 = sadd.s32 %s411, %s412
          %s414 = smul.addr %s413, 4
          %s415 = scalar_lea.vmem %s3, %s414
        $region56: #{tpu_custom_call.1} parent=51 // pred_fallthru
          _
        // Predicated region
        $region57: #{tpu_custom_call.1} parent=51 // pred_check
          %p416 = pneg %p157
        $region58: #{tpu_custom_call.1} parent=51 // pred_check_branch
          %418 = sbr.rel (%p416) target = $region60
        $region59: #{tpu_custom_call.1} parent=51 // pred_region
          %s419 = sand.u32 %s142, 1
          %s420 = scalar_lea.sflag [#allocation3], %s419
          %s421 = sand.u32 %s142, 1
          %s422 = smul.addr %s421, 4
          %s423 = scalar_lea.vmem [#allocation7], %s422
          %424 = dma.done %s420, 64
        $region60: #{tpu_custom_call.1} parent=51 // pred_fallthru
          _
      $region52: #{tpu_custom_call.1} parent=5 // pred_fallthru
        _
    $region6: #{tpu_custom_call.1} parent=1 // loop_footer
      %s20 = sadd.s32 1, %s16
    $region7: #{tpu_custom_call.1} parent=1 // loop_footer_branch
      %15 = sbr.rel target = $region3
    $region8: #{tpu_custom_call.1} parent=1 // loop_exit
      _
    %425 = vsyncpa [#allocation3], 1
    %s426 = scalar_lea.sflag [#allocation3], 1
    %427 = vsyncpa %s426, 1
    %428 = vsyncpa [#allocation4], 1
    %s429 = scalar_lea.sflag [#allocation4], 1
    %430 = vsyncpa %s429, 1
    %431 = vsyncpa [#allocation6], 1

</llo_original>
